<compile_context>
chip_gen: v7x
topology: tpu7x:2x2x1
jax: 0.10.0
libtpu: 0.0.40
codegen_flags: <defaults>
</compile_context>

<pallas_src>
import jax
import jax.numpy as jnp
from jax import lax
from jax.experimental import pallas as pl
from jax.experimental.pallas import tpu as pltpu
import numpy as np


def decoder_classifier_kernel(pos_ref, x_ref, w_enc_ref, b_enc_ref,
                              pooled_ref, h_ref):
    i = pl.program_id(1)                      # row / reduction axis (innermost)
    tm = x_ref.shape[0]
    B = pooled_ref.shape[0]

    @pl.when(i == 0)
    def _():
        pooled_ref[...] = jnp.zeros_like(pooled_ref)

    # ---- stand-in encoder layer on this (row tile, column tile) ----
    # tanh(x @ W_enc[:, cols] + b_enc[cols]); bf16 MXU operands, f32 accumulate.
    h_ref[...] = jnp.tanh(
        jnp.dot(x_ref[...], w_enc_ref[...], preferred_element_type=jnp.float32)
        + b_enc_ref[...])                                           # [tm, tn] f32

    # ---- pooled-row select: clamped dynamic sublane read, scaled by 0/1 ----
    # flat_pos comes from SMEM scalar prefetch; flat_pos == -1 (all-pad row)
    # never lands in range, so its contribution is exactly zero.
    base = i * tm
    rows = []
    for b in range(B):                        # B is small & static -> unrolled
        local = pos_ref[b] - base
        in_tile = jnp.logical_and(local >= 0, local < tm)
        lc = jnp.clip(local, 0, tm - 1)
        rows.append(h_ref[pl.ds(lc, 1), :] * in_tile.astype(jnp.float32))
    pooled_ref[...] += jnp.concatenate(rows, axis=0)                # [B, tn]


def decoder_classifier(input_ids, labels, class_weight, params,
                       tokenizer_pad_id, config_pad_id, tm=512, tn=512):
    """Mirrors DecoderClassifier.forward(input_ids, labels, weight)."""
    emb, w_enc, b_enc, w_cls, b_cls = params
    B, S = input_ids.shape
    Hin, Hout = w_enc.shape
    rows = B * S

    # ---- glue (no dense compute): bf16 gather, pad mask, pooled-row index ----
    # TODO(synk): fuse this gather into the kernel (scalar-prefetched input_ids
    # + batched make_async_copy row DMAs) to remove the x_emb HBM round trip.
    attention_mask = input_ids != tokenizer_pad_id                       # [B, S] bool
    x_emb = emb.astype(jnp.bfloat16)[input_ids].reshape(rows, Hin)       # bf16 gather
    seq_len = (jnp.argmax((input_ids == config_pad_id).astype(jnp.int32),
                          axis=-1) - 1) % S                              # [B]
    pooled_mask = jnp.take_along_axis(attention_mask, seq_len[:, None], axis=-1)[:, 0]
    flat_pos = jnp.where(pooled_mask, jnp.arange(B) * S + seq_len,
                         -1).astype(jnp.int32)                           # [B]

    # ---- row tiling (reduction axis, innermost) ----
    tm = max(8, min(int(tm), rows))
    tm -= tm % 8
    n_row = pl.cdiv(rows, tm)
    rows_p = n_row * tm
    if rows_p != rows:
        x_emb = jnp.pad(x_emb, ((0, rows_p - rows), (0, 0)))

    # ---- column tiling of the encoder output dim (parallel axis, outermost) ----
    # NOTE: in production keep the bf16 weight copy out of the per-call path.
    w_enc_bf = w_enc.astype(jnp.bfloat16)
    b_enc_f = b_enc.reshape(1, Hout).astype(jnp.float32)
    if int(tn) >= Hout:
        tn = Hout
        n_col = 1
        Hout_p = Hout
    else:
        tn = max(128, int(tn) - int(tn) % 128)
        n_col = pl.cdiv(Hout, tn)
        Hout_p = n_col * tn
        if Hout_p != Hout:       # zero-pad extra columns: tanh(0)=0, sliced off below
            w_enc_bf = jnp.pad(w_enc_bf, ((0, 0), (0, Hout_p - Hout)))
            b_enc_f = jnp.pad(b_enc_f, ((0, 0), (0, Hout_p - Hout)))

    # ---- VMEM budget: per-buffer accounting, capped by the chip's capacity ----
    try:
        vmem_cap = int(pltpu.get_tpu_info().vmem_capacity_bytes)
    except Exception:
        vmem_cap = 64 << 20                    # conservative (v7x per-core)
    w_bufs = 1 if n_col == 1 else 2
    vmem_bytes = (2 * tm * Hin * 2             # x tile (bf16, double-buffered)
                  + w_bufs * Hin * tn * 2      # w_enc column tile(s) (bf16)
                  + w_bufs * tn * 4            # b_enc tile(s) (f32)
                  + 2 * B * tn * 4             # resident pooled output block
                  + tm * tn * 4                # h scratch (f32)
                  + (8 << 20))                 # headroom: compiler temporaries
    vmem_bytes = int(min(max(vmem_bytes, 8 << 20), (vmem_cap * 7) // 8))

    def run(single_buffer_weights):
        # Single-buffer truly grid-invariant weight specs (n_col == 1 only);
        # when column-tiled they change with j and stay default double-buffered.
        inv = ({"pipeline_mode": pl.Buffered(1)}
               if (single_buffer_weights and n_col == 1) else {})
        grid_spec = pltpu.PrefetchScalarGridSpec(
            num_scalar_prefetch=1,
            grid=(n_col, n_row),
            in_specs=[
                pl.BlockSpec((tm, Hin), lambda j, i, pos: (i, 0)),         # x row tile
                pl.BlockSpec((Hin, tn), lambda j, i, pos: (0, j), **inv),  # W_enc cols
                pl.BlockSpec((1, tn), lambda j, i, pos: (0, j), **inv),    # b_enc cols
            ],
            out_specs=pl.BlockSpec((B, tn), lambda j, i, pos: (0, j)),
            scratch_shapes=[pltpu.VMEM((tm, tn), jnp.float32)],
        )
        return pl.pallas_call(
            decoder_classifier_kernel,
            out_shape=jax.ShapeDtypeStruct((B, Hout_p), jnp.float32),
            grid_spec=grid_spec,
            compiler_params=pltpu.CompilerParams(
                dimension_semantics=("parallel", "arbitrary"),
                vmem_limit_bytes=vmem_bytes),
        )(flat_pos, x_emb, w_enc_bf, b_enc_f)

    try:
        pooled_h = run(True)
    except Exception:   # guard: fall back if this Pallas build rejects Buffered(1)
        pooled_h = run(False)

    # ---- tiny classifier head + softmax + weighted CE (O(B*2)) in the wrapper ----
    pooled_h = pooled_h[:, :Hout]
    pooled_logits = jnp.einsum("bh,hk->bk", pooled_h, w_cls.astype(jnp.float32),
                               precision=lax.Precision.HIGHEST) + b_cls
    prob = jax.nn.softmax(pooled_logits, axis=-1)
    logp = jax.nn.log_softmax(pooled_logits, axis=-1)
    lab = labels.astype(jnp.int32)
    nll = -jnp.take_along_axis(logp, lab[:, None], axis=-1)[:, 0]
    wb = class_weight[lab]
    loss = jnp.sum(wb * nll) / jnp.sum(wb)
    return loss, prob


def _reference(input_ids, labels, class_weight, params,
               tokenizer_pad_id, config_pad_id):
    emb, w_enc, b_enc, w_cls, b_cls = params
    B, S = input_ids.shape
    mask = (input_ids != tokenizer_pad_id).astype(jnp.float32)
    x = emb[input_ids].astype(jnp.bfloat16)
    h = jnp.tanh(jnp.einsum("bsh,hk->bsk", x, w_enc.astype(jnp.bfloat16),
                            preferred_element_type=jnp.float32) + b_enc)
    h = h * mask[..., None]
    logits = jnp.einsum("bsh,hk->bsk", h, w_cls,
                        precision=lax.Precision.HIGHEST) + b_cls
    seq_len = (jnp.argmax((input_ids == config_pad_id).astype(jnp.int32),
                          axis=-1) - 1) % S
    pooled = logits[jnp.arange(B), seq_len]
    prob = jax.nn.softmax(pooled, axis=-1)
    logp = jax.nn.log_softmax(pooled, axis=-1)
    nll = -logp[jnp.arange(B), labels]
    wb = class_weight[labels]
    loss = jnp.sum(wb * nll) / jnp.sum(wb)
    return loss, prob


if __name__ == "__main__":
    PAD = 0  # tokenizer.pad_token_id == config.pad_token_id

    def make_case(key, B, S, H, V, pad_starts):
        k_emb, k_we, k_be, k_wc, k_bc, k_ids, k_lab = jax.random.split(key, 7)
        emb = jax.random.normal(k_emb, (V, H), jnp.float32) * 0.1
        w_enc = jax.random.normal(k_we, (H, H), jnp.float32) * 0.1
        b_enc = jax.random.normal(k_be, (H,), jnp.float32) * 0.1
        w_cls = jax.random.normal(k_wc, (H, 2), jnp.float32) * 0.1
        b_cls = jax.random.normal(k_bc, (2,), jnp.float32) * 0.1
        input_ids = jax.random.randint(k_ids, (B, S), 1, V)
        for r, p in enumerate(pad_starts):
            input_ids = input_ids.at[r, p:].set(PAD)
        labels = jax.random.randint(k_lab, (B,), 0, 2)
        return (emb, w_enc, b_enc, w_cls, b_cls), input_ids, labels

    class_weight = jnp.array([1.0, 2.0], jnp.float32)
    k1, k2 = jax.random.split(jax.random.PRNGKey(0))

    cases = [
        # (key, B, S, H, V, tm, tn, pad_starts)
        # 1) single-column path + multi-step row accumulation + degenerate
        #    all-pad row (flat_pos = -1 -> pooled logits == b_cls).
        (k1, 2, 8, 32, 16, 8, 512, (5, 0)),
        # 2) multi-column "parallel" axis path (tn=128, H=320 -> 3 col tiles,
        #    zero-padded output columns) + 4 row tiles.
        (k2, 2, 16, 320, 16, 8, 128, (13, 8)),
    ]
    for ck, B, S, H, V, tm_, tn_, pad_starts in cases:
        params, input_ids, labels = make_case(ck, B, S, H, V, pad_starts)
        loss, prob = decoder_classifier(input_ids, labels, class_weight, params,
                                        tokenizer_pad_id=PAD, config_pad_id=PAD,
                                        tm=tm_, tn=tn_)
        jax.block_until_ready((loss, prob))
        loss_ref, prob_ref = _reference(input_ids, labels, class_weight, params,
                                        tokenizer_pad_id=PAD, config_pad_id=PAD)
        np.testing.assert_allclose(np.asarray(prob), np.asarray(prob_ref),
                                   rtol=1e-4, atol=1e-4)
        np.testing.assert_allclose(np.asarray(loss), np.asarray(loss_ref),
                                   rtol=1e-4, atol=1e-4)
    print("KERNEL_OK")
</pallas_src>

<mosaic_0001>
module attributes {stable_mosaic.version = 11 : i64} {
  func.func @decoder_classifier_kernel(%arg0: i32, %arg1: i32, %arg2: memref<2xi32, #tpu.memory_space<smem>>, %arg3: memref<8x32xbf16, #tpu.memory_space<vmem>>, %arg4: memref<32x32xbf16, #tpu.memory_space<vmem>>, %arg5: memref<1x32xf32, #tpu.memory_space<vmem>>, %arg6: memref<2x32xf32, #tpu.memory_space<vmem>>, %arg7: memref<8x32xf32, #tpu.memory_space<vmem>>) attributes {dimension_semantics = [#tpu.dimension_semantics<parallel>, #tpu.dimension_semantics<arbitrary>], iteration_bounds = array<i64: 1, 2>, scalar_prefetch = 1 : i64, scratch_operands = 1 : i64, tpu.core_type = #tpu.core_type<tc>, window_params = [{transform_indices = @transform_0, window_bounds = array<i64: 8, 32>}, {pipeline_mode = #tpu.pipeline_mode<synchronous>, transform_indices = @transform_1, window_bounds = array<i64: 32, 32>}, {pipeline_mode = #tpu.pipeline_mode<synchronous>, transform_indices = @transform_2, window_bounds = array<i64: 1, 32>}, {transform_indices = @transform_3, window_bounds = array<i64: 2, 32>}]} {
    %c0_i32 = arith.constant 0 : i32
    %0 = arith.cmpi eq, %arg1, %c0_i32 : i32
    %1 = arith.extui %0 : i1 to i32
    %c0_i32_0 = arith.constant 0 : i32
    %2 = arith.cmpi ne, %1, %c0_i32_0 : i32
    scf.if %2 {
      %cst_22 = arith.constant 0.000000e+00 : f32
      %42 = vector.broadcast %cst_22 : f32 to vector<2x32xf32>
      %c0_23 = arith.constant 0 : index
      %c0_24 = arith.constant 0 : index
      %43 = vector.load %arg6[%c0_23, %c0_24] : memref<2x32xf32, #tpu.memory_space<vmem>>, vector<2x32xf32>
      tpu.vector_store %arg6[%c0_23, %c0_24], %42 {strides = array<i32>} : memref<2x32xf32, #tpu.memory_space<vmem>>, vector<2x32xf32>,
    } else {
    }
    %c0 = arith.constant 0 : index
    %c0_1 = arith.constant 0 : index
    %3 = vector.load %arg3[%c0, %c0_1] : memref<8x32xbf16, #tpu.memory_space<vmem>>, vector<8x32xbf16>
    %c0_2 = arith.constant 0 : index
    %c0_3 = arith.constant 0 : index
    %4 = vector.load %arg4[%c0_2, %c0_3] : memref<32x32xbf16, #tpu.memory_space<vmem>>, vector<32x32xbf16>
    %cst = arith.constant dense<0.000000e+00> : vector<8x32xf32>
    %5 = tpu.matmul %3, %4, %cst {dimension_numbers = #tpu.dot_dimension_numbers<[1], [0], [0], [1], [0, 0, 1, 1], [], []>} : vector<8x32xbf16>, vector<32x32xbf16>, vector<8x32xf32> -> vector<8x32xf32>
    %c0_4 = arith.constant 0 : index
    %c0_5 = arith.constant 0 : index
    %6 = vector.load %arg5[%c0_4, %c0_5] : memref<1x32xf32, #tpu.memory_space<vmem>>, vector<1x32xf32>
    %7 = vector.broadcast %6 : vector<1x32xf32> to vector<8x32xf32>
    %8 = arith.addf %5, %7 : vector<8x32xf32>
    %9 = math.tanh %8 : vector<8x32xf32>
    %c0_6 = arith.constant 0 : index
    %c0_7 = arith.constant 0 : index
    %10 = vector.load %arg7[%c0_6, %c0_7] : memref<8x32xf32, #tpu.memory_space<vmem>>, vector<8x32xf32>
    tpu.vector_store %arg7[%c0_6, %c0_7], %9 {strides = array<i32>} : memref<8x32xf32, #tpu.memory_space<vmem>>, vector<8x32xf32>,
    %c8_i32 = arith.constant 8 : i32
    %11 = arith.muli %arg1, %c8_i32 : i32
    %c0_8 = arith.constant 0 : index
    %12 = memref.load %arg2[%c0_8] : memref<2xi32, #tpu.memory_space<smem>>
    %13 = arith.subi %12, %11 : i32
    %c0_i32_9 = arith.constant 0 : i32
    %14 = arith.cmpi sge, %13, %c0_i32_9 : i32
    %c8_i32_10 = arith.constant 8 : i32
    %15 = arith.cmpi slt, %13, %c8_i32_10 : i32
    %16 = arith.andi %14, %15 : i1
    %c0_i32_11 = arith.constant 0 : i32
    %c7_i32 = arith.constant 7 : i32
    %17 = arith.maxsi %c0_i32_11, %13 : i32
    %18 = arith.minsi %c7_i32, %17 : i32
    %19 = arith.index_cast %18 : i32 to index
    %c0_12 = arith.constant 0 : index
    %20 = vector.load %arg7[%19, %c0_12] : memref<8x32xf32, #tpu.memory_space<vmem>>, vector<1x32xf32>
    %21 = arith.extui %16 : i1 to i32
    %22 = arith.sitofp %21 : i32 to f32
    %23 = vector.broadcast %22 : f32 to vector<1x32xf32>
    %24 = arith.mulf %20, %23 : vector<1x32xf32>
    %c1 = arith.constant 1 : index
    %25 = memref.load %arg2[%c1] : memref<2xi32, #tpu.memory_space<smem>>
    %26 = arith.subi %25, %11 : i32
    %c0_i32_13 = arith.constant 0 : i32
    %27 = arith.cmpi sge, %26, %c0_i32_13 : i32
    %c8_i32_14 = arith.constant 8 : i32
    %28 = arith.cmpi slt, %26, %c8_i32_14 : i32
    %29 = arith.andi %27, %28 : i1
    %c0_i32_15 = arith.constant 0 : i32
    %c7_i32_16 = arith.constant 7 : i32
    %30 = arith.maxsi %c0_i32_15, %26 : i32
    %31 = arith.minsi %c7_i32_16, %30 : i32
    %32 = arith.index_cast %31 : i32 to index
    %c0_17 = arith.constant 0 : index
    %33 = vector.load %arg7[%32, %c0_17] : memref<8x32xf32, #tpu.memory_space<vmem>>, vector<1x32xf32>
    %34 = arith.extui %29 : i1 to i32
    %35 = arith.sitofp %34 : i32 to f32
    %36 = vector.broadcast %35 : f32 to vector<1x32xf32>
    %37 = arith.mulf %33, %36 : vector<1x32xf32>
    %c0_18 = arith.constant 0 : index
    %c0_19 = arith.constant 0 : index
    %38 = vector.load %arg6[%c0_18, %c0_19] : memref<2x32xf32, #tpu.memory_space<vmem>>, vector<2x32xf32>
    %39 = tpu.concatenate %24, %37 in 0 : vector<1x32xf32>, vector<1x32xf32> -> vector<2x32xf32>
    %40 = arith.addf %38, %39 : vector<2x32xf32>
    %c0_20 = arith.constant 0 : index
    %c0_21 = arith.constant 0 : index
    %41 = vector.load %arg6[%c0_20, %c0_21] : memref<2x32xf32, #tpu.memory_space<vmem>>, vector<2x32xf32>
    tpu.vector_store %arg6[%c0_20, %c0_21], %40 {strides = array<i32>} : memref<2x32xf32, #tpu.memory_space<vmem>>, vector<2x32xf32>,
    return
  }
  func.func @transform_0(%arg0: i32, %arg1: i32, %arg2: memref<2xi32, #tpu.memory_space<smem>>) -> (i32, i32) {
    %c0_i32 = arith.constant 0 : i32
    %c0_i32_0 = arith.constant 0 : i32
    return %arg1, %c0_i32 : i32, i32
  }
  func.func @transform_1(%arg0: i32, %arg1: i32, %arg2: memref<2xi32, #tpu.memory_space<smem>>) -> (i32, i32) {
    %c0_i32 = arith.constant 0 : i32
    %c0_i32_0 = arith.constant 0 : i32
    return %c0_i32, %arg0 : i32, i32
  }
  func.func @transform_2(%arg0: i32, %arg1: i32, %arg2: memref<2xi32, #tpu.memory_space<smem>>) -> (i32, i32) {
    %c0_i32 = arith.constant 0 : i32
    %c0_i32_0 = arith.constant 0 : i32
    return %c0_i32, %arg0 : i32, i32
  }
  func.func @transform_3(%arg0: i32, %arg1: i32, %arg2: memref<2xi32, #tpu.memory_space<smem>>) -> (i32, i32) {
    %c0_i32 = arith.constant 0 : i32
    %c0_i32_0 = arith.constant 0 : i32
    return %c0_i32, %arg0 : i32, i32
  }
}

module attributes {stable_mosaic.version = 11 : i64} {
  func.func @decoder_classifier_kernel(%arg0: i32, %arg1: i32, %arg2: memref<2xi32, #tpu.memory_space<smem>>, %arg3: memref<8x32xbf16, #tpu.memory_space<vmem>>, %arg4: memref<32x32xbf16, #tpu.memory_space<vmem>>, %arg5: memref<1x32xf32, #tpu.memory_space<vmem>>, %arg6: memref<2x32xf32, #tpu.memory_space<vmem>>, %arg7: memref<8x32xf32, #tpu.memory_space<vmem>>) attributes {dimension_semantics = [#tpu.dimension_semantics<parallel>, #tpu.dimension_semantics<arbitrary>], iteration_bounds = array<i64: 1, 2>, scalar_prefetch = 1 : i64, scratch_operands = 1 : i64, tpu.core_type = #tpu.core_type<tc>, window_params = [{transform_indices = @transform_0, window_bounds = array<i64: 8, 32>}, {transform_indices = @transform_1, window_bounds = array<i64: 32, 32>}, {transform_indices = @transform_2, window_bounds = array<i64: 1, 32>}, {transform_indices = @transform_3, window_bounds = array<i64: 2, 32>}]} {
    %c0_i32 = arith.constant 0 : i32
    %0 = arith.cmpi eq, %arg1, %c0_i32 : i32
    %1 = arith.extui %0 : i1 to i32
    %c0_i32_0 = arith.constant 0 : i32
    %2 = arith.cmpi ne, %1, %c0_i32_0 : i32
    scf.if %2 {
      %cst_22 = arith.constant 0.000000e+00 : f32
      %42 = vector.broadcast %cst_22 : f32 to vector<2x32xf32>
      %c0_23 = arith.constant 0 : index
      %c0_24 = arith.constant 0 : index
      %43 = vector.load %arg6[%c0_23, %c0_24] : memref<2x32xf32, #tpu.memory_space<vmem>>, vector<2x32xf32>
      tpu.vector_store %arg6[%c0_23, %c0_24], %42 {strides = array<i32>} : memref<2x32xf32, #tpu.memory_space<vmem>>, vector<2x32xf32>,
    } else {
    }
    %c0 = arith.constant 0 : index
    %c0_1 = arith.constant 0 : index
    %3 = vector.load %arg3[%c0, %c0_1] : memref<8x32xbf16, #tpu.memory_space<vmem>>, vector<8x32xbf16>
    %c0_2 = arith.constant 0 : index
    %c0_3 = arith.constant 0 : index
    %4 = vector.load %arg4[%c0_2, %c0_3] : memref<32x32xbf16, #tpu.memory_space<vmem>>, vector<32x32xbf16>
    %cst = arith.constant dense<0.000000e+00> : vector<8x32xf32>
    %5 = tpu.matmul %3, %4, %cst {dimension_numbers = #tpu.dot_dimension_numbers<[1], [0], [0], [1], [0, 0, 1, 1], [], []>} : vector<8x32xbf16>, vector<32x32xbf16>, vector<8x32xf32> -> vector<8x32xf32>
    %c0_4 = arith.constant 0 : index
    %c0_5 = arith.constant 0 : index
    %6 = vector.load %arg5[%c0_4, %c0_5] : memref<1x32xf32, #tpu.memory_space<vmem>>, vector<1x32xf32>
    %7 = vector.broadcast %6 : vector<1x32xf32> to vector<8x32xf32>
    %8 = arith.addf %5, %7 : vector<8x32xf32>
    %9 = math.tanh %8 : vector<8x32xf32>
    %c0_6 = arith.constant 0 : index
    %c0_7 = arith.constant 0 : index
    %10 = vector.load %arg7[%c0_6, %c0_7] : memref<8x32xf32, #tpu.memory_space<vmem>>, vector<8x32xf32>
    tpu.vector_store %arg7[%c0_6, %c0_7], %9 {strides = array<i32>} : memref<8x32xf32, #tpu.memory_space<vmem>>, vector<8x32xf32>,
    %c8_i32 = arith.constant 8 : i32
    %11 = arith.muli %arg1, %c8_i32 : i32
    %c0_8 = arith.constant 0 : index
    %12 = memref.load %arg2[%c0_8] : memref<2xi32, #tpu.memory_space<smem>>
    %13 = arith.subi %12, %11 : i32
    %c0_i32_9 = arith.constant 0 : i32
    %14 = arith.cmpi sge, %13, %c0_i32_9 : i32
    %c8_i32_10 = arith.constant 8 : i32
    %15 = arith.cmpi slt, %13, %c8_i32_10 : i32
    %16 = arith.andi %14, %15 : i1
    %c0_i32_11 = arith.constant 0 : i32
    %c7_i32 = arith.constant 7 : i32
    %17 = arith.maxsi %c0_i32_11, %13 : i32
    %18 = arith.minsi %c7_i32, %17 : i32
    %19 = arith.index_cast %18 : i32 to index
    %c0_12 = arith.constant 0 : index
    %20 = vector.load %arg7[%19, %c0_12] : memref<8x32xf32, #tpu.memory_space<vmem>>, vector<1x32xf32>
    %21 = arith.extui %16 : i1 to i32
    %22 = arith.sitofp %21 : i32 to f32
    %23 = vector.broadcast %22 : f32 to vector<1x32xf32>
    %24 = arith.mulf %20, %23 : vector<1x32xf32>
    %c1 = arith.constant 1 : index
    %25 = memref.load %arg2[%c1] : memref<2xi32, #tpu.memory_space<smem>>
    %26 = arith.subi %25, %11 : i32
    %c0_i32_13 = arith.constant 0 : i32
    %27 = arith.cmpi sge, %26, %c0_i32_13 : i32
    %c8_i32_14 = arith.constant 8 : i32
    %28 = arith.cmpi slt, %26, %c8_i32_14 : i32
    %29 = arith.andi %27, %28 : i1
    %c0_i32_15 = arith.constant 0 : i32
    %c7_i32_16 = arith.constant 7 : i32
    %30 = arith.maxsi %c0_i32_15, %26 : i32
    %31 = arith.minsi %c7_i32_16, %30 : i32
    %32 = arith.index_cast %31 : i32 to index
    %c0_17 = arith.constant 0 : index
    %33 = vector.load %arg7[%32, %c0_17] : memref<8x32xf32, #tpu.memory_space<vmem>>, vector<1x32xf32>
    %34 = arith.extui %29 : i1 to i32
    %35 = arith.sitofp %34 : i32 to f32
    %36 = vector.broadcast %35 : f32 to vector<1x32xf32>
    %37 = arith.mulf %33, %36 : vector<1x32xf32>
    %c0_18 = arith.constant 0 : index
    %c0_19 = arith.constant 0 : index
    %38 = vector.load %arg6[%c0_18, %c0_19] : memref<2x32xf32, #tpu.memory_space<vmem>>, vector<2x32xf32>
    %39 = tpu.concatenate %24, %37 in 0 : vector<1x32xf32>, vector<1x32xf32> -> vector<2x32xf32>
    %40 = arith.addf %38, %39 : vector<2x32xf32>
    %c0_20 = arith.constant 0 : index
    %c0_21 = arith.constant 0 : index
    %41 = vector.load %arg6[%c0_20, %c0_21] : memref<2x32xf32, #tpu.memory_space<vmem>>, vector<2x32xf32>
    tpu.vector_store %arg6[%c0_20, %c0_21], %40 {strides = array<i32>} : memref<2x32xf32, #tpu.memory_space<vmem>>, vector<2x32xf32>,
    return
  }
  func.func @transform_0(%arg0: i32, %arg1: i32, %arg2: memref<2xi32, #tpu.memory_space<smem>>) -> (i32, i32) {
    %c0_i32 = arith.constant 0 : i32
    %c0_i32_0 = arith.constant 0 : i32
    return %arg1, %c0_i32 : i32, i32
  }
  func.func @transform_1(%arg0: i32, %arg1: i32, %arg2: memref<2xi32, #tpu.memory_space<smem>>) -> (i32, i32) {
    %c0_i32 = arith.constant 0 : i32
    %c0_i32_0 = arith.constant 0 : i32
    return %c0_i32, %arg0 : i32, i32
  }
  func.func @transform_2(%arg0: i32, %arg1: i32, %arg2: memref<2xi32, #tpu.memory_space<smem>>) -> (i32, i32) {
    %c0_i32 = arith.constant 0 : i32
    %c0_i32_0 = arith.constant 0 : i32
    return %c0_i32, %arg0 : i32, i32
  }
  func.func @transform_3(%arg0: i32, %arg1: i32, %arg2: memref<2xi32, #tpu.memory_space<smem>>) -> (i32, i32) {
    %c0_i32 = arith.constant 0 : i32
    %c0_i32_0 = arith.constant 0 : i32
    return %c0_i32, %arg0 : i32, i32
  }
}

</mosaic_0001>

<llo_original>
// kernel: tpu_custom_call.1
$region0: #{tpu_custom_call.1}
  #allocation0 [shape = 'u32[]', space=smem, size = 0x4, offset = 0x4, fixed_abs, tag = 'smem constant byte address 0x4 - core index']
  #allocation1 [shape = 'u32[144,128]{1,0:T(1,128)}', space=vmem, size = 0x12000, scoped, tag = 'internal scratch']
  #allocation2 [shape = 'f32[8,32]{1,0:T(8,128)}', space=vmem, size = 0x1000, scoped, tag = 'scratch operand']
  #allocation3 [shape = 's32[1]{0}', space=sflag, size = 0x4, scoped, tag = 'scoped memory for tpu_custom_call.1']
  #allocation4 [shape = 'u8[512]{0}', space=smem, size = 0x200, scoped, tag = 'prefetched SMEM operand 0']
  %s0 = inlined_call_operand.hbm [shape: s32[2], index: 0, kind: input, shape index: {}]
  %s1 = inlined_call_operand.hbm [shape: bf16[16,32], index: 1, kind: input, shape index: {}]
  %s2 = inlined_call_operand.hbm [shape: bf16[32,32], index: 2, kind: input, shape index: {}]
  %s3 = inlined_call_operand.vmem [shape: f32[1,32], index: 3, kind: input, shape index: {}]
  %s4 = inlined_call_operand.hbm [shape: f32[2,32], index: 4, kind: output, shape index: {}]
  %s5 = sld [smem:[#allocation0]]
  $region57: #{tpu_custom_call.1} parent=0
    _
  %s7 = ssub.s32 1, %s5
  %s8 = scalar_select 0, %s7, %s5
  %10 = dma.hbm_to_smem %s0, 16, [#allocation4], [#allocation3]
  %11 = dma.done [#allocation3], 16
  %12 = sfence
  $region1: #{tpu_custom_call.1} parent=0
    #allocation5 [shape = 'u8[4096]{0}', space=vmem, size = 0x1000, scoped, tag = 'input window, operand 1']
    #allocation6 [shape = 's32[2]{0}', space=sflag, size = 0x8, scoped, tag = 'scoped memory for tpu_custom_call.1']
    #allocation7 [shape = 's32[2]{0}', space=sflag, size = 0x8, scoped, tag = 'scoped memory for tpu_custom_call.1']
    #allocation8 [shape = 'u8[8192]{0}', space=vmem, size = 0x2000, scoped, tag = 'input window, operand 2, single buffered']
    #allocation9 [shape = 's32[1]{0}', space=sflag, size = 0x4, scoped, tag = 'scoped memory for tpu_custom_call.1']
    #allocation10 [shape = 'u8[1024]{0}', space=vmem, size = 0x400, scoped, tag = 'output window, operand 0, single buffered']
    %13 = vsyncpa [#allocation6], 0
    %s14 = scalar_lea.sflag [#allocation6], 1
    %15 = vsyncpa %s14, 0
    %16 = vsyncpa [#allocation9], 0
    %17 = vsyncpa [#allocation7], 0
    loop: start=0, step=1, limit=4
    $region2: #{tpu_custom_call.1} parent=1 // loop_pre_header
      _
    $region3: #{tpu_custom_call.1} parent=1 // loop_header
      %s19 = sphi 0, %s23
      %p20 = scmp.ge.s32.totalorder %s19, 4
      %s26 = sphi 0, %s38
      %s27 = sphi 0, %s34
      %s28 = sphi 0, %s26
      %s29 = sphi 0, %s27
      %s30 = sphi 0, %s28
      %s31 = sphi 0, %s29
      %s41 = sphi 0, %s43
      %s44 = sphi 0, %s41
      %s45 = sphi 0, %s44
      %s61 = sphi 0, %s45
      %s67 = sphi 0, %s69
      %s70 = sphi 0, %s67
      %s71 = sphi 0, %s70
      %s87 = sphi 0, %s71
      %s93 = sphi 0, %s95
      %s96 = sphi 0, %s93
      %s97 = sphi 0, %s96
      %s113 = sphi 0, %s97
      %s119 = sphi 0, %s121
      %s122 = sphi 0, %s119
      %s123 = sphi 0, %s122
      %s139 = sphi 0, %s123
    $region4: #{tpu_custom_call.1} parent=1 // loop_header_branch
      %22 = sbr.rel (%p20) target = $region8
    $region5: #{tpu_custom_call.1} parent=1 // loop_body
      %s24 = ssub.s32 %s19, 1
      %s25 = ssub.s32 %s19, 2
      %s32 = sadd.s32 1, %s27
      %p33 = scmp.ge.s32.totalorder %s32, 2
      %s34 = scalar_select %p33, 0, %s32
      %s35 = sadd.s32 1, %s26
      %s36 = scalar_select %p33, %s35, %s26
      %p37 = scmp.ge.s32.totalorder %s36, 1
      %s38 = scalar_select %p37, 0, %s36
      %s39 = ssub.s32 %s27, %s34
      %p40 = scmp.eq.s32.totalorder %s39, 0
      %s42 = sadd.s32 %s41, 1
      %s43 = scalar_select %p40, %s41, %s42
      %p46 = pneg %p40
      %p47 = scmp.eq.s32.totalorder %s19, 1
      %p48 = por %p46, %p47
      %p49 = scmp.ne.s32.totalorder %s41, %s44
      %p50 = scmp.eq.s32.totalorder %s19, 0
      %p51 = por %p49, %p50
      %p52 = scmp.ne.s32.totalorder %s41, %s44
      %p53 = scmp.eq.s32.totalorder %s24, 1
      %p54 = por %p52, %p53
      %p55 = scmp.ne.s32.totalorder %s44, %s45
      %p56 = scmp.eq.s32.totalorder %s24, 0
      %p57 = por %p55, %p56
      %p58 = scmp.ne.s32.totalorder %s44, %s45
      %p59 = scmp.eq.s32.totalorder %s25, 1
      %p60 = por %p58, %p59
      %p62 = scmp.ne.s32.totalorder %s45, %s61
      %p63 = scmp.eq.s32.totalorder %s25, 0
      %p64 = por %p62, %p63
      %s65 = ssub.s32 %s26, %s38
      %p66 = scmp.eq.s32.totalorder %s65, 0
      %s68 = sadd.s32 %s67, 1
      %s69 = scalar_select %p66, %s67, %s68
      %p72 = pneg %p66
      %p73 = scmp.eq.s32.totalorder %s19, 1
      %p74 = por %p72, %p73
      %p75 = scmp.ne.s32.totalorder %s67, %s70
      %p76 = scmp.eq.s32.totalorder %s19, 0
      %p77 = por %p75, %p76
      %p78 = scmp.ne.s32.totalorder %s67, %s70
      %p79 = scmp.eq.s32.totalorder %s24, 1
      %p80 = por %p78, %p79
      %p81 = scmp.ne.s32.totalorder %s70, %s71
      %p82 = scmp.eq.s32.totalorder %s24, 0
      %p83 = por %p81, %p82
      %p84 = scmp.ne.s32.totalorder %s70, %s71
      %p85 = scmp.eq.s32.totalorder %s25, 1
      %p86 = por %p84, %p85
      %p88 = scmp.ne.s32.totalorder %s71, %s87
      %p89 = scmp.eq.s32.totalorder %s25, 0
      %p90 = por %p88, %p89
      %s91 = ssub.s32 %s26, %s38
      %p92 = scmp.eq.s32.totalorder %s91, 0
      %s94 = sadd.s32 %s93, 1
      %s95 = scalar_select %p92, %s93, %s94
      %p98 = pneg %p92
      %p99 = scmp.eq.s32.totalorder %s19, 1
      %p100 = por %p98, %p99
      %p101 = scmp.ne.s32.totalorder %s93, %s96
      %p102 = scmp.eq.s32.totalorder %s19, 0
      %p103 = por %p101, %p102
      %p104 = scmp.ne.s32.totalorder %s93, %s96
      %p105 = scmp.eq.s32.totalorder %s24, 1
      %p106 = por %p104, %p105
      %p107 = scmp.ne.s32.totalorder %s96, %s97
      %p108 = scmp.eq.s32.totalorder %s24, 0
      %p109 = por %p107, %p108
      %p110 = scmp.ne.s32.totalorder %s96, %s97
      %p111 = scmp.eq.s32.totalorder %s25, 1
      %p112 = por %p110, %p111
      %p114 = scmp.ne.s32.totalorder %s97, %s113
      %p115 = scmp.eq.s32.totalorder %s25, 0
      %p116 = por %p114, %p115
      %s117 = ssub.s32 %s26, %s38
      %p118 = scmp.eq.s32.totalorder %s117, 0
      %s120 = sadd.s32 %s119, 1
      %s121 = scalar_select %p118, %s119, %s120
      %p124 = pneg %p118
      %p125 = scmp.eq.s32.totalorder %s19, 1
      %p126 = por %p124, %p125
      %p127 = scmp.ne.s32.totalorder %s119, %s122
      %p128 = scmp.eq.s32.totalorder %s19, 0
      %p129 = por %p127, %p128
      %p130 = scmp.ne.s32.totalorder %s119, %s122
      %p131 = scmp.eq.s32.totalorder %s24, 1
      %p132 = por %p130, %p131
      %p133 = scmp.ne.s32.totalorder %s122, %s123
      %p134 = scmp.eq.s32.totalorder %s24, 0
      %p135 = por %p133, %p134
      %p136 = scmp.ne.s32.totalorder %s122, %s123
      %p137 = scmp.eq.s32.totalorder %s25, 1
      %p138 = por %p136, %p137
      %p140 = scmp.ne.s32.totalorder %s123, %s139
      %p141 = scmp.eq.s32.totalorder %s25, 0
      %p142 = por %p140, %p141
      %p143 = scmp.le.s32.totalorder 1, %s19
      %p144 = scmp.lt.s32.totalorder %s19, 3
      %p145 = pnand %p143, %p144
      %p146 = pneg %p145
      // Predicated region
      $region9: #{tpu_custom_call.1} parent=5 // pred_check
        _
      $region10: #{tpu_custom_call.1} parent=5 // pred_check_branch
        %148 = sbr.rel (%p145) target = $region12
      $region11: #{tpu_custom_call.1} parent=5 // pred_region
        %s149 = ssub.s32 %s19, 1
        // Predicated region
        $region13: #{tpu_custom_call.1} parent=11 // pred_check
          %p150 = pneg %p83
        $region14: #{tpu_custom_call.1} parent=11 // pred_check_branch
          %152 = sbr.rel (%p150) target = $region16
        $region15: #{tpu_custom_call.1} parent=11 // pred_region
          %s154 = ssub.s32 256, 256
          %155 = vsyncadd [#allocation9], %s154
          %s156 = smul.addr %s28, 64
          %s157 = scalar_lea.hbm %s2, %s156
          %s158 = sshll.u32 [#allocation8], 4
          %s159 = int_to_ptr.vmem [resolvable:$true] %s158
          %164 = dma.hbm_to_vmem [thread:$0]  %s157, 256, %s159, [#allocation9], 64, 64, 4
        $region16: #{tpu_custom_call.1} parent=11 // pred_fallthru
          _
        // Predicated region
        $region17: #{tpu_custom_call.1} parent=11 // pred_check
          %p165 = pneg %p109
        $region18: #{tpu_custom_call.1} parent=11 // pred_check_branch
          %167 = sbr.rel (%p165) target = $region20
        $region19: #{tpu_custom_call.1} parent=11 // pred_region
          %p168 = scmp.lt.s32.totalorder %s28, 0
          %s169 = scalar_select %p168, %s28, 0
          %s170 = scalar_lea.vmem %s3, %s169
        $region20: #{tpu_custom_call.1} parent=11 // pred_fallthru
          _
      $region12: #{tpu_custom_call.1} parent=5 // pred_fallthru
        _
      %p171 = scmp.lt.s32.totalorder %s19, 2
      // Predicated region
      $region21: #{tpu_custom_call.1} parent=5 // pred_check
        %p172 = pneg %p171
      $region22: #{tpu_custom_call.1} parent=5 // pred_check_branch
        %174 = sbr.rel (%p172) target = $region24
      $region23: #{tpu_custom_call.1} parent=5 // pred_region
        // Predicated region
        $region25: #{tpu_custom_call.1} parent=23 // pred_check
          %p175 = pneg %p51
        $region26: #{tpu_custom_call.1} parent=23 // pred_check_branch
          %177 = sbr.rel (%p175) target = $region28
        $region27: #{tpu_custom_call.1} parent=23 // pred_region
          %s178 = sand.u32 %s41, 1
          %s179 = scalar_lea.sflag [#allocation6], %s178
          %s180 = sand.u32 %s41, 1
          %s181 = smul.addr %s180, 4
          %s182 = scalar_lea.vmem [#allocation5], %s181
          %s184 = ssub.s32 64, 64
          %185 = vsyncadd %s179, %s184
          %s186 = smul.addr %s27, 64
          %s187 = scalar_lea.hbm %s1, %s186
          %s189 = sshll.u32 %s182, 4
          %s190 = int_to_ptr.vmem [resolvable:$true] %s189
          %192 = dma.hbm_to_vmem [thread:$0]  %s187, 64, %s190, %s179
        $region28: #{tpu_custom_call.1} parent=23 // pred_fallthru
          _
      $region24: #{tpu_custom_call.1} parent=5 // pred_fallthru
        _
      %p193 = scmp.le.s32.totalorder 1, %s19
      %p194 = scmp.lt.s32.totalorder %s19, 3
      %p195 = pnand %p193, %p194
      %p196 = pneg %p195
      // Predicated region
      $region29: #{tpu_custom_call.1} parent=5 // pred_check
        _
      $region30: #{tpu_custom_call.1} parent=5 // pred_check_branch
        %198 = sbr.rel (%p195) target = $region32
      $region31: #{tpu_custom_call.1} parent=5 // pred_region
        %s199 = ssub.s32 %s19, 1
        %s200 = sand.u32 %s44, 1
        %s201 = scalar_lea.sflag [#allocation6], %s200
        %s202 = sand.u32 %s44, 1
        %s203 = smul.addr %s202, 4
        %s204 = scalar_lea.vmem [#allocation5], %s203
        // Predicated region
        $region33: #{tpu_custom_call.1} parent=31 // pred_check
          %p205 = pneg %p57
        $region34: #{tpu_custom_call.1} parent=31 // pred_check_branch
          %207 = sbr.rel (%p205) target = $region36
        $region35: #{tpu_custom_call.1} parent=31 // pred_region
          %208 = dma.done %s201, 64
        $region36: #{tpu_custom_call.1} parent=31 // pred_fallthru
          _
        // Predicated region
        $region37: #{tpu_custom_call.1} parent=31 // pred_check
          %p209 = pneg %p83
        $region38: #{tpu_custom_call.1} parent=31 // pred_check_branch
          %211 = sbr.rel (%p209) target = $region40
        $region39: #{tpu_custom_call.1} parent=31 // pred_region
          %212 = dma.done [#allocation9], 256
        $region40: #{tpu_custom_call.1} parent=31 // pred_fallthru
          _
        %s213 = sand.u32 %s44, 1
        %s214 = scalar_lea.sflag [#allocation6], %s213
        %s215 = sand.u32 %s44, 1
        %s216 = smul.addr %s215, 4
        %s217 = scalar_lea.vmem [#allocation5], %s216
        %p218 = pneg %p57
        %p219 = pneg %p54
        %p220 = pneg %p83
        %p221 = pneg %p80
        %p222 = scmp.lt.s32.totalorder %s28, 0
        %s223 = scalar_select %p222, %s28, 0
        %s224 = scalar_lea.vmem %s3, %s223
        %p225 = pneg %p109
        %p226 = pneg %p106
        %p227 = pneg %p135
        %p228 = pneg %p132
        %p229 = scmp.lt.s32.totalorder %s28, 0
        %s230 = scalar_select %p229, %s28, 0
        %s231 = scalar_lea.vmem %s3, %s230
        %p233 = scmp.eq.s32.totalorder %s29, 0
        // Predicated region
        $region41: #{tpu_custom_call.1} parent=31 // pred_check
          %p234 = pneg %p233
        $region42: #{tpu_custom_call.1} parent=31 // pred_check_branch
          %236 = sbr.rel (%p234) target = $region44
        $region43: #{tpu_custom_call.1} parent=31 // pred_region
          %vm237 = vcmask 254976
          %238 = vst.msk [vmem:[#allocation10] sm:$0x3] %vm237, 0.0
        $region44: #{tpu_custom_call.1} parent=31 // pred_fallthru
          _
        %v239 = vld [vmem:[%s204] sm:$0xf]
        %v240 = vld [vmem:[#allocation8] sm:$0xf]
        %v241 = vld [vmem:[#allocation8 + $0x4] sm:$0xf]
        %v242 = vld [vmem:[#allocation8 + $0x8] sm:$0xf]
        %v243 = vld [vmem:[#allocation8 + $0xc] sm:$0xf]
        %v244 = vld [vmem:[%s231] sm:$0x1]
        %v246 = vlaneseq
        %v247 = vshrl.u32 %v246, 7
        %v248 = vsub.s32 0, %v247
        %v249 = vrot.slane %v244, %v248
        %v255 = vunpack.c.l.b16 %v240
        %v256 = vunpack.c.l.b16 %v241
        %v257 = vunpack.c.l.b16 %v242
        %v258 = vunpack.c.l.b16 %v243
        %v259 = vpack.c.b16 %v256, %v255
        %v260 = vpack.c.b16 %v258, %v257
        %vm263 = vcmask 261120
        %v265 = vsel %vm263, %v239, 0
        %267 = vmatprep.subr.bf16.mxu0 0
        %268 = vmatpush1.bf16.msra.mxu0 %v259
        %269 = vmatprep.subr.bf16.mxu0 0
        %270 = vmatpush1.bf16.msra.mxu0 %v260
        %271 = vmatprep.subr.bf16.mxu0 0
        %272 = vmatpush1.bf16.msra.mxu0 0
        %273 = vmatprep.subr.bf16.mxu0 0
        %274 = vmatpush1.bf16.msra.mxu0 0
        %275 = vmatprep.subr.bf16.mxu0 0
        %276 = vmatpush1.bf16.msra.mxu0 0
        %277 = vmatprep.subr.bf16.mxu0 0
        %278 = vmatpush1.bf16.msra.mxu0 0
        %279 = vmatprep.subr.bf16.mxu0 0
        %280 = vmatpush1.bf16.msra.mxu0 0
        %281 = vmatprep.subr.bf16.mxu0 0
        %282 = vmatpush1.bf16.msra.mxu0 0
        %283 = vmatprep.subr.bf16.mxu0 0
        %284 = vmatpush1.bf16.msra.mxu0 0
        %285 = vmatprep.subr.bf16.mxu0 0
        %286 = vmatpush1.bf16.msra.mxu0 0
        %287 = vmatprep.subr.bf16.mxu0 0
        %288 = vmatpush1.bf16.msra.mxu0 0
        %289 = vmatprep.subr.bf16.mxu0 0
        %290 = vmatpush1.bf16.msra.mxu0 0
        %291 = vmatprep.subr.bf16.mxu0 0
        %292 = vmatpush1.bf16.msra.mxu0 0
        %293 = vmatprep.subr.bf16.mxu0 0
        %294 = vmatpush1.bf16.msra.mxu0 0
        %295 = vmatprep.subr.bf16.mxu0 0
        %296 = vmatpush1.bf16.msra.mxu0 0
        %297 = vmatprep.subr.bf16.mxu0 0
        %298 = vmatpush1.bf16.msra.mxu0 0
        %299 = vmatprep.mubr.bf16.mxu0 0
        %300 = vmatmul.mubr.bf16.gmra.mrb[0].mxu0 %v265
        %v301 = vpop.f32.mrb[0].mxu0
        %v302 = vadd.f32 %v249, %v301
        %v303 = vpop.f32.mrb[0].mxu0
        %v304 = vpop.f32.mrb[0].mxu0
        %v305 = vpop.f32.mrb[0].mxu0
        %306 = vdwg.mxu0
        %v307 = vtanh.pop %v302
        %308 = vst.msk [vmem:[#allocation2] sm:$0xff] %vm263, %v307
        %s309 = smul.u32 %s29, 8
        %s310 = sld [smem:[#allocation4]]
        %s311 = ssub.s32 %s310, %s309
        %p312 = scmp.ge.s32.totalorder %s311, 0
        %p313 = scmp.lt.s32.totalorder %s311, 8
        %p314 = pnand %p312, %p313
        %p315 = pneg %p314
        %p316 = scmp.gt.s32.totalorder %s311, 0
        %s317 = scalar_select %p316, %s311, 0
        %p318 = scmp.lt.s32.totalorder %s317, 7
        %s319 = scalar_select %p318, %s317, 7
        %s320 = scalar_lea.vmem [#allocation2], %s319
        %v321 = vld [vmem:[%s320] sm:$0x1]
        %s322 = scalar_select %p315, 1, 0
        %s323 = scvt.s32.f32 %s322
        %v324 = vstv %s323
        %v325 = vmul.f32 %v321, %v324
        %s326 = sld [smem:[#allocation4 + $0x1]]
        %s327 = ssub.s32 %s326, %s309
        %p328 = scmp.ge.s32.totalorder %s327, 0
        %p329 = scmp.lt.s32.totalorder %s327, 8
        %p330 = pnand %p328, %p329
        %p331 = pneg %p330
        %p332 = scmp.gt.s32.totalorder %s327, 0
        %s333 = scalar_select %p332, %s327, 0
        %p334 = scmp.lt.s32.totalorder %s333, 7
        %s335 = scalar_select %p334, %s333, 7
        %s336 = scalar_lea.vmem [#allocation2], %s335
        %v337 = vld [vmem:[%s336] sm:$0x1]
        %s338 = scalar_select %p331, 1, 0
        %s339 = scvt.s32.f32 %s338
        %v340 = vstv %s339
        %v341 = vmul.f32 %v337, %v340
        %v342 = vld [vmem:[#allocation10] sm:$0x3]
        %v344 = vrot.slane %v341, 7
        %vm346 = vcmask 1040384
        %v347 = vsel %vm346, %v325, %v344
        %v348 = vadd.f32 %v342, %v347
        %vm349 = vcmask 254976
        %350 = vst.msk [vmem:[#allocation10] sm:$0x3] %vm349, %v348
        // Predicated region
        $region45: #{tpu_custom_call.1} parent=31 // pred_check
          %p351 = pneg %p132
        $region46: #{tpu_custom_call.1} parent=31 // pred_check_branch
          %353 = sbr.rel (%p351) target = $region48
        $region47: #{tpu_custom_call.1} parent=31 // pred_region
          %s355 = ssub.s32 32, 32
          %356 = vsyncadd [#allocation7], %s355
          %s357 = smul.addr %s28, 32
          %s358 = scalar_lea.hbm %s4, %s357
          %s360 = sshll.u32 [#allocation10], 4
          %s361 = int_to_ptr.vmem [resolvable:$true] %s360
          %363 = dma.vmem_to_hbm [thread:$0]  %s361, 32, %s358, [#allocation7]
        $region48: #{tpu_custom_call.1} parent=31 // pred_fallthru
          _
        // Predicated region
        $region49: #{tpu_custom_call.1} parent=31 // pred_check
          %p364 = pneg %p132
        $region50: #{tpu_custom_call.1} parent=31 // pred_check_branch
          %366 = sbr.rel (%p364) target = $region52
        $region51: #{tpu_custom_call.1} parent=31 // pred_region
          %367 = dma.done [#allocation7], 32
        $region52: #{tpu_custom_call.1} parent=31 // pred_fallthru
          _
      $region32: #{tpu_custom_call.1} parent=5 // pred_fallthru
        _
      %p368 = scmp.le.s32.totalorder 2, %s19
      // Predicated region
      $region53: #{tpu_custom_call.1} parent=5 // pred_check
        %p369 = pneg %p368
      $region54: #{tpu_custom_call.1} parent=5 // pred_check_branch
        %371 = sbr.rel (%p369) target = $region56
      $region55: #{tpu_custom_call.1} parent=5 // pred_region
        %s372 = ssub.s32 %s19, 2
      $region56: #{tpu_custom_call.1} parent=5 // pred_fallthru
        _
    $region6: #{tpu_custom_call.1} parent=1 // loop_footer
      %s23 = sadd.s32 1, %s19
    $region7: #{tpu_custom_call.1} parent=1 // loop_footer_branch
      %18 = sbr.rel target = $region3
    $region8: #{tpu_custom_call.1} parent=1 // loop_exit
      _
    %373 = vsyncpa [#allocation6], 1
    %s374 = scalar_lea.sflag [#allocation6], 1
    %375 = vsyncpa %s374, 1
    %376 = vsyncpa [#allocation9], 1
    %377 = vsyncpa [#allocation7], 1
    %s378 = scalar_lea.sflag [#allocation7], 1
    %379 = vsyncpa %s378, 1

// kernel: tpu_custom_call.1
$region0: #{tpu_custom_call.1}
  #allocation0 [shape = 'u32[]', space=smem, size = 0x4, offset = 0x4, fixed_abs, tag = 'smem constant byte address 0x4 - core index']
  #allocation1 [shape = 'u32[144,128]{1,0:T(1,128)}', space=vmem, size = 0x12000, scoped, tag = 'internal scratch']
  #allocation2 [shape = 'f32[8,32]{1,0:T(8,128)}', space=vmem, size = 0x1000, scoped, tag = 'scratch operand']
  #allocation3 [shape = 's32[1]{0}', space=sflag, size = 0x4, scoped, tag = 'scoped memory for tpu_custom_call.1']
  #allocation4 [shape = 'u8[512]{0}', space=smem, size = 0x200, scoped, tag = 'prefetched SMEM operand 0']
  %s0 = inlined_call_operand.hbm [shape: s32[2], index: 0, kind: input, shape index: {}]
  %s1 = inlined_call_operand.hbm [shape: bf16[16,32], index: 1, kind: input, shape index: {}]
  %s2 = inlined_call_operand.hbm [shape: bf16[32,32], index: 2, kind: input, shape index: {}]
  %s3 = inlined_call_operand.vmem [shape: f32[1,32], index: 3, kind: input, shape index: {}]
  %s4 = inlined_call_operand.hbm [shape: f32[2,32], index: 4, kind: output, shape index: {}]
  %s5 = sld [smem:[#allocation0]]
  $region57: #{tpu_custom_call.1} parent=0
    _
  %s7 = ssub.s32 1, %s5
  %s8 = scalar_select 0, %s7, %s5
  %10 = dma.hbm_to_smem %s0, 16, [#allocation4], [#allocation3]
  %11 = dma.done [#allocation3], 16
  %12 = sfence
  $region1: #{tpu_custom_call.1} parent=0
    #allocation5 [shape = 'u8[4096]{0}', space=vmem, size = 0x1000, scoped, tag = 'input window, operand 1']
    #allocation6 [shape = 's32[2]{0}', space=sflag, size = 0x8, scoped, tag = 'scoped memory for tpu_custom_call.1']
    #allocation7 [shape = 's32[2]{0}', space=sflag, size = 0x8, scoped, tag = 'scoped memory for tpu_custom_call.1']
    #allocation8 [shape = 'u8[8192]{0}', space=vmem, size = 0x2000, scoped, tag = 'input window, operand 2, single buffered']
    #allocation9 [shape = 's32[1]{0}', space=sflag, size = 0x4, scoped, tag = 'scoped memory for tpu_custom_call.1']
    #allocation10 [shape = 'u8[1024]{0}', space=vmem, size = 0x400, scoped, tag = 'output window, operand 0, single buffered']
    %13 = vsyncpa [#allocation6], 0
    %s14 = scalar_lea.sflag [#allocation6], 1
    %15 = vsyncpa %s14, 0
    %16 = vsyncpa [#allocation9], 0
    %17 = vsyncpa [#allocation7], 0
    loop: start=0, step=1, limit=4
    $region2: #{tpu_custom_call.1} parent=1 // loop_pre_header
      _
    $region3: #{tpu_custom_call.1} parent=1 // loop_header
      %s19 = sphi 0, %s23
      %p20 = scmp.ge.s32.totalorder %s19, 4
      %s26 = sphi 0, %s38
      %s27 = sphi 0, %s34
      %s28 = sphi 0, %s26
      %s29 = sphi 0, %s27
      %s30 = sphi 0, %s28
      %s31 = sphi 0, %s29
      %s41 = sphi 0, %s43
      %s44 = sphi 0, %s41
      %s45 = sphi 0, %s44
      %s61 = sphi 0, %s45
      %s67 = sphi 0, %s69
      %s70 = sphi 0, %s67
      %s71 = sphi 0, %s70
      %s87 = sphi 0, %s71
      %s93 = sphi 0, %s95
      %s96 = sphi 0, %s93
      %s97 = sphi 0, %s96
      %s113 = sphi 0, %s97
      %s119 = sphi 0, %s121
      %s122 = sphi 0, %s119
      %s123 = sphi 0, %s122
      %s139 = sphi 0, %s123
    $region4: #{tpu_custom_call.1} parent=1 // loop_header_branch
      %22 = sbr.rel (%p20) target = $region8
    $region5: #{tpu_custom_call.1} parent=1 // loop_body
      %s24 = ssub.s32 %s19, 1
      %s25 = ssub.s32 %s19, 2
      %s32 = sadd.s32 1, %s27
      %p33 = scmp.ge.s32.totalorder %s32, 2
      %s34 = scalar_select %p33, 0, %s32
      %s35 = sadd.s32 1, %s26
      %s36 = scalar_select %p33, %s35, %s26
      %p37 = scmp.ge.s32.totalorder %s36, 1
      %s38 = scalar_select %p37, 0, %s36
      %s39 = ssub.s32 %s27, %s34
      %p40 = scmp.eq.s32.totalorder %s39, 0
      %s42 = sadd.s32 %s41, 1
      %s43 = scalar_select %p40, %s41, %s42
      %p46 = pneg %p40
      %p47 = scmp.eq.s32.totalorder %s19, 1
      %p48 = por %p46, %p47
      %p49 = scmp.ne.s32.totalorder %s41, %s44
      %p50 = scmp.eq.s32.totalorder %s19, 0
      %p51 = por %p49, %p50
      %p52 = scmp.ne.s32.totalorder %s41, %s44
      %p53 = scmp.eq.s32.totalorder %s24, 1
      %p54 = por %p52, %p53
      %p55 = scmp.ne.s32.totalorder %s44, %s45
      %p56 = scmp.eq.s32.totalorder %s24, 0
      %p57 = por %p55, %p56
      %p58 = scmp.ne.s32.totalorder %s44, %s45
      %p59 = scmp.eq.s32.totalorder %s25, 1
      %p60 = por %p58, %p59
      %p62 = scmp.ne.s32.totalorder %s45, %s61
      %p63 = scmp.eq.s32.totalorder %s25, 0
      %p64 = por %p62, %p63
      %s65 = ssub.s32 %s26, %s38
      %p66 = scmp.eq.s32.totalorder %s65, 0
      %s68 = sadd.s32 %s67, 1
      %s69 = scalar_select %p66, %s67, %s68
      %p72 = pneg %p66
      %p73 = scmp.eq.s32.totalorder %s19, 1
      %p74 = por %p72, %p73
      %p75 = scmp.ne.s32.totalorder %s67, %s70
      %p76 = scmp.eq.s32.totalorder %s19, 0
      %p77 = por %p75, %p76
      %p78 = scmp.ne.s32.totalorder %s67, %s70
      %p79 = scmp.eq.s32.totalorder %s24, 1
      %p80 = por %p78, %p79
      %p81 = scmp.ne.s32.totalorder %s70, %s71
      %p82 = scmp.eq.s32.totalorder %s24, 0
      %p83 = por %p81, %p82
      %p84 = scmp.ne.s32.totalorder %s70, %s71
      %p85 = scmp.eq.s32.totalorder %s25, 1
      %p86 = por %p84, %p85
      %p88 = scmp.ne.s32.totalorder %s71, %s87
      %p89 = scmp.eq.s32.totalorder %s25, 0
      %p90 = por %p88, %p89
      %s91 = ssub.s32 %s26, %s38
      %p92 = scmp.eq.s32.totalorder %s91, 0
      %s94 = sadd.s32 %s93, 1
      %s95 = scalar_select %p92, %s93, %s94
      %p98 = pneg %p92
      %p99 = scmp.eq.s32.totalorder %s19, 1
      %p100 = por %p98, %p99
      %p101 = scmp.ne.s32.totalorder %s93, %s96
      %p102 = scmp.eq.s32.totalorder %s19, 0
      %p103 = por %p101, %p102
      %p104 = scmp.ne.s32.totalorder %s93, %s96
      %p105 = scmp.eq.s32.totalorder %s24, 1
      %p106 = por %p104, %p105
      %p107 = scmp.ne.s32.totalorder %s96, %s97
      %p108 = scmp.eq.s32.totalorder %s24, 0
      %p109 = por %p107, %p108
      %p110 = scmp.ne.s32.totalorder %s96, %s97
      %p111 = scmp.eq.s32.totalorder %s25, 1
      %p112 = por %p110, %p111
      %p114 = scmp.ne.s32.totalorder %s97, %s113
      %p115 = scmp.eq.s32.totalorder %s25, 0
      %p116 = por %p114, %p115
      %s117 = ssub.s32 %s26, %s38
      %p118 = scmp.eq.s32.totalorder %s117, 0
      %s120 = sadd.s32 %s119, 1
      %s121 = scalar_select %p118, %s119, %s120
      %p124 = pneg %p118
      %p125 = scmp.eq.s32.totalorder %s19, 1
      %p126 = por %p124, %p125
      %p127 = scmp.ne.s32.totalorder %s119, %s122
      %p128 = scmp.eq.s32.totalorder %s19, 0
      %p129 = por %p127, %p128
      %p130 = scmp.ne.s32.totalorder %s119, %s122
      %p131 = scmp.eq.s32.totalorder %s24, 1
      %p132 = por %p130, %p131
      %p133 = scmp.ne.s32.totalorder %s122, %s123
      %p134 = scmp.eq.s32.totalorder %s24, 0
      %p135 = por %p133, %p134
      %p136 = scmp.ne.s32.totalorder %s122, %s123
      %p137 = scmp.eq.s32.totalorder %s25, 1
      %p138 = por %p136, %p137
      %p140 = scmp.ne.s32.totalorder %s123, %s139
      %p141 = scmp.eq.s32.totalorder %s25, 0
      %p142 = por %p140, %p141
      %p143 = scmp.le.s32.totalorder 1, %s19
      %p144 = scmp.lt.s32.totalorder %s19, 3
      %p145 = pnand %p143, %p144
      %p146 = pneg %p145
      // Predicated region
      $region9: #{tpu_custom_call.1} parent=5 // pred_check
        _
      $region10: #{tpu_custom_call.1} parent=5 // pred_check_branch
        %148 = sbr.rel (%p145) target = $region12
      $region11: #{tpu_custom_call.1} parent=5 // pred_region
        %s149 = ssub.s32 %s19, 1
        // Predicated region
        $region13: #{tpu_custom_call.1} parent=11 // pred_check
          %p150 = pneg %p83
        $region14: #{tpu_custom_call.1} parent=11 // pred_check_branch
          %152 = sbr.rel (%p150) target = $region16
        $region15: #{tpu_custom_call.1} parent=11 // pred_region
          %s154 = ssub.s32 256, 256
          %155 = vsyncadd [#allocation9], %s154
          %s156 = smul.addr %s28, 64
          %s157 = scalar_lea.hbm %s2, %s156
          %s158 = sshll.u32 [#allocation8], 4
          %s159 = int_to_ptr.vmem [resolvable:$true] %s158
          %164 = dma.hbm_to_vmem [thread:$0]  %s157, 256, %s159, [#allocation9], 64, 64, 4
        $region16: #{tpu_custom_call.1} parent=11 // pred_fallthru
          _
        // Predicated region
        $region17: #{tpu_custom_call.1} parent=11 // pred_check
          %p165 = pneg %p109
        $region18: #{tpu_custom_call.1} parent=11 // pred_check_branch
          %167 = sbr.rel (%p165) target = $region20
        $region19: #{tpu_custom_call.1} parent=11 // pred_region
          %p168 = scmp.lt.s32.totalorder %s28, 0
          %s169 = scalar_select %p168, %s28, 0
          %s170 = scalar_lea.vmem %s3, %s169
        $region20: #{tpu_custom_call.1} parent=11 // pred_fallthru
          _
      $region12: #{tpu_custom_call.1} parent=5 // pred_fallthru
        _
      %p171 = scmp.lt.s32.totalorder %s19, 2
      // Predicated region
      $region21: #{tpu_custom_call.1} parent=5 // pred_check
        %p172 = pneg %p171
      $region22: #{tpu_custom_call.1} parent=5 // pred_check_branch
        %174 = sbr.rel (%p172) target = $region24
      $region23: #{tpu_custom_call.1} parent=5 // pred_region
        // Predicated region
        $region25: #{tpu_custom_call.1} parent=23 // pred_check
          %p175 = pneg %p51
        $region26: #{tpu_custom_call.1} parent=23 // pred_check_branch
          %177 = sbr.rel (%p175) target = $region28
        $region27: #{tpu_custom_call.1} parent=23 // pred_region
          %s178 = sand.u32 %s41, 1
          %s179 = scalar_lea.sflag [#allocation6], %s178
          %s180 = sand.u32 %s41, 1
          %s181 = smul.addr %s180, 4
          %s182 = scalar_lea.vmem [#allocation5], %s181
          %s184 = ssub.s32 64, 64
          %185 = vsyncadd %s179, %s184
          %s186 = smul.addr %s27, 64
          %s187 = scalar_lea.hbm %s1, %s186
          %s189 = sshll.u32 %s182, 4
          %s190 = int_to_ptr.vmem [resolvable:$true] %s189
          %192 = dma.hbm_to_vmem [thread:$0]  %s187, 64, %s190, %s179
        $region28: #{tpu_custom_call.1} parent=23 // pred_fallthru
          _
      $region24: #{tpu_custom_call.1} parent=5 // pred_fallthru
        _
      %p193 = scmp.le.s32.totalorder 1, %s19
      %p194 = scmp.lt.s32.totalorder %s19, 3
      %p195 = pnand %p193, %p194
      %p196 = pneg %p195
      // Predicated region
      $region29: #{tpu_custom_call.1} parent=5 // pred_check
        _
      $region30: #{tpu_custom_call.1} parent=5 // pred_check_branch
        %198 = sbr.rel (%p195) target = $region32
      $region31: #{tpu_custom_call.1} parent=5 // pred_region
        %s199 = ssub.s32 %s19, 1
        %s200 = sand.u32 %s44, 1
        %s201 = scalar_lea.sflag [#allocation6], %s200
        %s202 = sand.u32 %s44, 1
        %s203 = smul.addr %s202, 4
        %s204 = scalar_lea.vmem [#allocation5], %s203
        // Predicated region
        $region33: #{tpu_custom_call.1} parent=31 // pred_check
          %p205 = pneg %p57
        $region34: #{tpu_custom_call.1} parent=31 // pred_check_branch
          %207 = sbr.rel (%p205) target = $region36
        $region35: #{tpu_custom_call.1} parent=31 // pred_region
          %208 = dma.done %s201, 64
        $region36: #{tpu_custom_call.1} parent=31 // pred_fallthru
          _
        // Predicated region
        $region37: #{tpu_custom_call.1} parent=31 // pred_check
          %p209 = pneg %p83
        $region38: #{tpu_custom_call.1} parent=31 // pred_check_branch
          %211 = sbr.rel (%p209) target = $region40
        $region39: #{tpu_custom_call.1} parent=31 // pred_region
          %212 = dma.done [#allocation9], 256
        $region40: #{tpu_custom_call.1} parent=31 // pred_fallthru
          _
        %s213 = sand.u32 %s44, 1
        %s214 = scalar_lea.sflag [#allocation6], %s213
        %s215 = sand.u32 %s44, 1
        %s216 = smul.addr %s215, 4
        %s217 = scalar_lea.vmem [#allocation5], %s216
        %p218 = pneg %p57
        %p219 = pneg %p54
        %p220 = pneg %p83
        %p221 = pneg %p80
        %p222 = scmp.lt.s32.totalorder %s28, 0
        %s223 = scalar_select %p222, %s28, 0
        %s224 = scalar_lea.vmem %s3, %s223
        %p225 = pneg %p109
        %p226 = pneg %p106
        %p227 = pneg %p135
        %p228 = pneg %p132
        %p229 = scmp.lt.s32.totalorder %s28, 0
        %s230 = scalar_select %p229, %s28, 0
        %s231 = scalar_lea.vmem %s3, %s230
        %p233 = scmp.eq.s32.totalorder %s29, 0
        // Predicated region
        $region41: #{tpu_custom_call.1} parent=31 // pred_check
          %p234 = pneg %p233
        $region42: #{tpu_custom_call.1} parent=31 // pred_check_branch
          %236 = sbr.rel (%p234) target = $region44
        $region43: #{tpu_custom_call.1} parent=31 // pred_region
          %vm237 = vcmask 254976
          %238 = vst.msk [vmem:[#allocation10] sm:$0x3] %vm237, 0.0
        $region44: #{tpu_custom_call.1} parent=31 // pred_fallthru
          _
        %v239 = vld [vmem:[%s204] sm:$0xf]
        %v240 = vld [vmem:[#allocation8] sm:$0xf]
        %v241 = vld [vmem:[#allocation8 + $0x4] sm:$0xf]
        %v242 = vld [vmem:[#allocation8 + $0x8] sm:$0xf]
        %v243 = vld [vmem:[#allocation8 + $0xc] sm:$0xf]
        %v244 = vld [vmem:[%s231] sm:$0x1]
        %v246 = vlaneseq
        %v247 = vshrl.u32 %v246, 7
        %v248 = vsub.s32 0, %v247
        %v249 = vrot.slane %v244, %v248
        %v255 = vunpack.c.l.b16 %v240
        %v256 = vunpack.c.l.b16 %v241
        %v257 = vunpack.c.l.b16 %v242
        %v258 = vunpack.c.l.b16 %v243
        %v259 = vpack.c.b16 %v256, %v255
        %v260 = vpack.c.b16 %v258, %v257
        %vm263 = vcmask 261120
        %v265 = vsel %vm263, %v239, 0
        %267 = vmatprep.subr.bf16.mxu0 0
        %268 = vmatpush1.bf16.msra.mxu0 %v259
        %269 = vmatprep.subr.bf16.mxu0 0
        %270 = vmatpush1.bf16.msra.mxu0 %v260
        %271 = vmatprep.subr.bf16.mxu0 0
        %272 = vmatpush1.bf16.msra.mxu0 0
        %273 = vmatprep.subr.bf16.mxu0 0
        %274 = vmatpush1.bf16.msra.mxu0 0
        %275 = vmatprep.subr.bf16.mxu0 0
        %276 = vmatpush1.bf16.msra.mxu0 0
        %277 = vmatprep.subr.bf16.mxu0 0
        %278 = vmatpush1.bf16.msra.mxu0 0
        %279 = vmatprep.subr.bf16.mxu0 0
        %280 = vmatpush1.bf16.msra.mxu0 0
        %281 = vmatprep.subr.bf16.mxu0 0
        %282 = vmatpush1.bf16.msra.mxu0 0
        %283 = vmatprep.subr.bf16.mxu0 0
        %284 = vmatpush1.bf16.msra.mxu0 0
        %285 = vmatprep.subr.bf16.mxu0 0
        %286 = vmatpush1.bf16.msra.mxu0 0
        %287 = vmatprep.subr.bf16.mxu0 0
        %288 = vmatpush1.bf16.msra.mxu0 0
        %289 = vmatprep.subr.bf16.mxu0 0
        %290 = vmatpush1.bf16.msra.mxu0 0
        %291 = vmatprep.subr.bf16.mxu0 0
        %292 = vmatpush1.bf16.msra.mxu0 0
        %293 = vmatprep.subr.bf16.mxu0 0
        %294 = vmatpush1.bf16.msra.mxu0 0
        %295 = vmatprep.subr.bf16.mxu0 0
        %296 = vmatpush1.bf16.msra.mxu0 0
        %297 = vmatprep.subr.bf16.mxu0 0
        %298 = vmatpush1.bf16.msra.mxu0 0
        %299 = vmatprep.mubr.bf16.mxu0 0
        %300 = vmatmul.mubr.bf16.gmra.mrb[0].mxu0 %v265
        %v301 = vpop.f32.mrb[0].mxu0
        %v302 = vadd.f32 %v249, %v301
        %v303 = vpop.f32.mrb[0].mxu0
        %v304 = vpop.f32.mrb[0].mxu0
        %v305 = vpop.f32.mrb[0].mxu0
        %306 = vdwg.mxu0
        %v307 = vtanh.pop %v302
        %308 = vst.msk [vmem:[#allocation2] sm:$0xff] %vm263, %v307
        %s309 = smul.u32 %s29, 8
        %s310 = sld [smem:[#allocation4]]
        %s311 = ssub.s32 %s310, %s309
        %p312 = scmp.ge.s32.totalorder %s311, 0
        %p313 = scmp.lt.s32.totalorder %s311, 8
        %p314 = pnand %p312, %p313
        %p315 = pneg %p314
        %p316 = scmp.gt.s32.totalorder %s311, 0
        %s317 = scalar_select %p316, %s311, 0
        %p318 = scmp.lt.s32.totalorder %s317, 7
        %s319 = scalar_select %p318, %s317, 7
        %s320 = scalar_lea.vmem [#allocation2], %s319
        %v321 = vld [vmem:[%s320] sm:$0x1]
        %s322 = scalar_select %p315, 1, 0
        %s323 = scvt.s32.f32 %s322
        %v324 = vstv %s323
        %v325 = vmul.f32 %v321, %v324
        %s326 = sld [smem:[#allocation4 + $0x1]]
        %s327 = ssub.s32 %s326, %s309
        %p328 = scmp.ge.s32.totalorder %s327, 0
        %p329 = scmp.lt.s32.totalorder %s327, 8
        %p330 = pnand %p328, %p329
        %p331 = pneg %p330
        %p332 = scmp.gt.s32.totalorder %s327, 0
        %s333 = scalar_select %p332, %s327, 0
        %p334 = scmp.lt.s32.totalorder %s333, 7
        %s335 = scalar_select %p334, %s333, 7
        %s336 = scalar_lea.vmem [#allocation2], %s335
        %v337 = vld [vmem:[%s336] sm:$0x1]
        %s338 = scalar_select %p331, 1, 0
        %s339 = scvt.s32.f32 %s338
        %v340 = vstv %s339
        %v341 = vmul.f32 %v337, %v340
        %v342 = vld [vmem:[#allocation10] sm:$0x3]
        %v344 = vrot.slane %v341, 7
        %vm346 = vcmask 1040384
        %v347 = vsel %vm346, %v325, %v344
        %v348 = vadd.f32 %v342, %v347
        %vm349 = vcmask 254976
        %350 = vst.msk [vmem:[#allocation10] sm:$0x3] %vm349, %v348
        // Predicated region
        $region45: #{tpu_custom_call.1} parent=31 // pred_check
          %p351 = pneg %p132
        $region46: #{tpu_custom_call.1} parent=31 // pred_check_branch
          %353 = sbr.rel (%p351) target = $region48
        $region47: #{tpu_custom_call.1} parent=31 // pred_region
          %s355 = ssub.s32 32, 32
          %356 = vsyncadd [#allocation7], %s355
          %s357 = smul.addr %s28, 32
          %s358 = scalar_lea.hbm %s4, %s357
          %s360 = sshll.u32 [#allocation10], 4
          %s361 = int_to_ptr.vmem [resolvable:$true] %s360
          %363 = dma.vmem_to_hbm [thread:$0]  %s361, 32, %s358, [#allocation7]
        $region48: #{tpu_custom_call.1} parent=31 // pred_fallthru
          _
        // Predicated region
        $region49: #{tpu_custom_call.1} parent=31 // pred_check
          %p364 = pneg %p132
        $region50: #{tpu_custom_call.1} parent=31 // pred_check_branch
          %366 = sbr.rel (%p364) target = $region52
        $region51: #{tpu_custom_call.1} parent=31 // pred_region
          %367 = dma.done [#allocation7], 32
        $region52: #{tpu_custom_call.1} parent=31 // pred_fallthru
          _
      $region32: #{tpu_custom_call.1} parent=5 // pred_fallthru
        _
      %p368 = scmp.le.s32.totalorder 2, %s19
      // Predicated region
      $region53: #{tpu_custom_call.1} parent=5 // pred_check
        %p369 = pneg %p368
      $region54: #{tpu_custom_call.1} parent=5 // pred_check_branch
        %371 = sbr.rel (%p369) target = $region56
      $region55: #{tpu_custom_call.1} parent=5 // pred_region
        %s372 = ssub.s32 %s19, 2
      $region56: #{tpu_custom_call.1} parent=5 // pred_fallthru
        _
    $region6: #{tpu_custom_call.1} parent=1 // loop_footer
      %s23 = sadd.s32 1, %s19
    $region7: #{tpu_custom_call.1} parent=1 // loop_footer_branch
      %18 = sbr.rel target = $region3
    $region8: #{tpu_custom_call.1} parent=1 // loop_exit
      _
    %373 = vsyncpa [#allocation6], 1
    %s374 = scalar_lea.sflag [#allocation6], 1
    %375 = vsyncpa %s374, 1
    %376 = vsyncpa [#allocation9], 1
    %377 = vsyncpa [#allocation7], 1
    %s378 = scalar_lea.sflag [#allocation7], 1
    %379 = vsyncpa %s378, 1

</llo_original>
